<compile_context>
chip_gen: v6e
topology: v6e:2x2x1
jax: 0.10.0
libtpu: 0.0.40
codegen_flags: <defaults>
</compile_context>

<pallas_src>
import functools

import jax
import jax.numpy as jnp
from jax import lax
from jax.experimental import pallas as pl
from jax.experimental.pallas import tpu as pltpu

_LANES = 128


def _round_up(x, m):
    return (x + m - 1) // m * m


def _focal_ce_kernel(x_ref, t_ref, w_ref, o_ref, *,
                     n_valid, num_classes, gamma, tile_s, chunk_s, lanes):
    """One grid step: accumulate focal loss over a (C, tile_s, lanes) logits tile.

    x_ref: (C, tile_s, lanes) logits (native dtype)   t_ref: (tile_s, lanes) int targets
    w_ref: (C,) f32 class weights in SMEM             o_ref: (chunk_s, lanes) f32 partial sums
    """
    i = pl.program_id(0)
    n_chunks = tile_s // chunk_s

    # Hoist scalar weight reads out of the chunk loop (SMEM scalar loads).
    w = [w_ref[c] for c in range(num_classes)]

    def tile_sum(masked):
        def body(ci, acc):
            s0 = pl.multiple_of(ci * chunk_s, chunk_s)

            # (chunk_s, lanes) per class — dense (8,128)-aligned vregs, f32 in-register.
            x = [x_ref[c, pl.ds(s0, chunk_s), :].astype(jnp.float32)
                 for c in range(num_classes)]
            ts = t_ref[pl.ds(s0, chunk_s), :].astype(jnp.int32) + 1  # shifted targets

            # Numerically stable log-sum-exp over the C class planes (pure VPU/EUP).
            m = x[0]
            for c in range(1, num_classes):
                m = jnp.maximum(m, x[c])
            s = jnp.exp(x[0] - m)
            for c in range(1, num_classes):
                s = s + jnp.exp(x[c] - m)
            lse = m + jnp.log(s)

            # Select target-class logit / class weight via element-wise selects.
            x_t = x[0]
            w_t = jnp.zeros_like(m) + w[0]
            for c in range(1, num_classes):
                sel = ts == c
                x_t = jnp.where(sel, x[c], x_t)
                w_t = jnp.where(sel, w[c], w_t)

            nll = lse - x_t                    # -log_softmax at target class
            ce = w_t * nll                     # weighted CE, reduction='none'
            pt = jnp.exp(-ce)
            omp = 1.0 - pt

            g = float(gamma)
            if g == 2.0:
                fw = omp * omp                 # avoid jnp.power -> exp/log on EUP
            elif g == int(g) and g >= 0.0:
                fw = jnp.ones_like(omp)
                for _ in range(int(g)):
                    fw = fw * omp
            else:
                fw = jnp.power(omp, g)

            focal = fw * ce                    # alpha folded into wrapper finalize

            if masked:
                # Global sample index of element (row, lane) of this chunk.
                row = lax.broadcasted_iota(jnp.int32, focal.shape, 0)
                lane = lax.broadcasted_iota(jnp.int32, focal.shape, 1)
                idx = (i * tile_s + s0 + row) * lanes + lane
                focal = jnp.where(idx < n_valid, focal, 0.0)

            return acc + focal

        return lax.fori_loop(0, n_chunks, body,
                             jnp.zeros((chunk_s, lanes), jnp.float32))

    # Only tiles that extend past the valid N samples pay for the mask.
    needs_mask = (i + 1) * (tile_s * lanes) > n_valid

    @pl.when(jnp.logical_not(needs_mask))
    def _full_tile():
        o_ref[...] = tile_sum(masked=False)

    @pl.when(needs_mask)
    def _ragged_tile():
        o_ref[...] = tile_sum(masked=True)


@functools.partial(jax.jit,
                   static_argnames=("gamma", "alpha", "tile_s", "chunk_s"))
def weighted_focal_cross_entropy_loss(inputs, targets, class_weights=None,
                                      gamma=2.0, alpha=0.25,
                                      tile_s=1024, chunk_s=32):
    """inputs: (N, C) float logits; targets: (N,) ints in {-1, 0, ..., C-2}."""
    lanes = _LANES
    if class_weights is None:
        class_weights = jnp.array([100.0, 1.0, 100.0], dtype=jnp.float32)
    class_weights = jnp.asarray(class_weights, dtype=jnp.float32)

    n, c = inputs.shape
    assert tile_s % chunk_s == 0 and chunk_s % 8 == 0

    # Pad N up to one chunk quantum so the (C, S, 128) reshape and the in-kernel chunk
    # loop are exact; padded / ragged samples are zeroed by the in-kernel mask.
    quantum = chunk_s * lanes
    n_pad = _round_up(n, quantum)
    s_total = n_pad // lanes
    tile_s_eff = min(tile_s, s_total)          # multiple of chunk_s by construction
    num_tiles = pl.cdiv(s_total, tile_s_eff)

    x = inputs
    t = targets                                # targets keep their native int dtype
    if n_pad != n:
        x = jnp.pad(x, ((0, n_pad - n), (0, 0)))
        t = jnp.pad(t, (0, n_pad - n))
    # Single lane-dense relayout (pad+transpose+reshape fuse under jit): (N,C)->(C,S,128).
    x_csl = jnp.transpose(x, (1, 0)).reshape(c, s_total, lanes)
    t_sl = t.reshape(s_total, lanes)

    kernel = functools.partial(
        _focal_ce_kernel, n_valid=n, num_classes=c, gamma=float(gamma),
        tile_s=tile_s_eff, chunk_s=chunk_s, lanes=lanes)

    partials = pl.pallas_call(
        kernel,
        grid=(num_tiles,),
        in_specs=[
            pl.BlockSpec((c, tile_s_eff, lanes), lambda i: (0, i, 0)),   # logits tile
            pl.BlockSpec((tile_s_eff, lanes), lambda i: (i, 0)),         # targets tile
            pl.BlockSpec(memory_space=pltpu.MemorySpace.SMEM),           # class weights
        ],
        out_specs=pl.BlockSpec((None, chunk_s, lanes), lambda i: (i, 0, 0)),
        out_shape=jax.ShapeDtypeStruct((num_tiles, chunk_s, lanes), jnp.float32),
        compiler_params=pltpu.CompilerParams(
            dimension_semantics=("parallel",)),   # no carried state -> megacore-shardable
    )(x_csl, t_sl, class_weights)

    # Tiny finalize: sum the lane-dense per-tile partials, fold in alpha and 1/N.
    return jnp.sum(partials) * jnp.float32(float(alpha) / n)


def _reference(inputs, targets, class_weights, gamma=2.0, alpha=0.25):
    # Pure-JAX reference mirroring torch.nn.functional.cross_entropy(reduction='none').
    t = (targets + 1).astype(jnp.int32)
    logp = jax.nn.log_softmax(inputs.astype(jnp.float32), axis=1)
    nll = -jnp.take_along_axis(logp, t[:, None], axis=1)[:, 0]
    ce = class_weights[t] * nll
    pt = jnp.exp(-ce)
    focal = alpha * (1.0 - pt) ** gamma * ce
    return focal.mean()


if __name__ == "__main__":
    key = jax.random.PRNGKey(0)
    k1, k2, k3, k4 = jax.random.split(key, 4)

    class_weights = jnp.array([100.0, 1.0, 100.0], dtype=jnp.float32)

    # Small shape consistent with the module: batch of 16 rows, 3 classes.
    N, C = 16, 3
    inputs = jax.random.normal(k1, (N, C), dtype=jnp.float32)
    targets = jax.random.randint(k2, (N,), -1, 2, dtype=jnp.int32)   # {-1, 0, 1}
    loss = jax.block_until_ready(
        weighted_focal_cross_entropy_loss(inputs, targets, class_weights))
    ref = _reference(inputs, targets, class_weights)
    if not jnp.allclose(loss, ref, rtol=1e-4, atol=1e-4):
        raise AssertionError(f"single-tile mismatch: kernel={loss} ref={ref}")

    # bf16 logits path (native dtype kept in HBM/VMEM, f32 math in-kernel).
    inputs_bf16 = inputs.astype(jnp.bfloat16)
    loss_bf16 = jax.block_until_ready(
        weighted_focal_cross_entropy_loss(inputs_bf16, targets, class_weights))
    ref_bf16 = _reference(inputs_bf16, targets, class_weights)
    if not jnp.allclose(loss_bf16, ref_bf16, rtol=1e-3, atol=1e-3):
        raise AssertionError(f"bf16 mismatch: kernel={loss_bf16} ref={ref_bf16}")

    # Multi-tile path: grid > 1, unmasked full tile + masked ragged tile, parallel axis.
    N2 = 5000
    inputs2 = jax.random.normal(k3, (N2, C), dtype=jnp.float32)
    targets2 = jax.random.randint(k4, (N2,), -1, 2, dtype=jnp.int32)
    loss2 = jax.block_until_ready(
        weighted_focal_cross_entropy_loss(inputs2, targets2, class_weights,
                                          tile_s=32, chunk_s=32))
    ref2 = _reference(inputs2, targets2, class_weights)
    if not jnp.allclose(loss2, ref2, rtol=1e-4, atol=1e-4):
        raise AssertionError(f"multi-tile mismatch: kernel={loss2} ref={ref2}")

    print("KERNEL_OK")
</pallas_src>

<mosaic_0001>
module attributes {stable_mosaic.version = 11 : i64} {
  func.func @_focal_ce_kernel(%arg0: i32, %arg1: memref<3x32x128xf32, #tpu.memory_space<vmem>>, %arg2: memref<32x128xi32, #tpu.memory_space<vmem>>, %arg3: memref<3xf32, #tpu.memory_space<smem>>, %arg4: memref<1x32x128xf32, #tpu.memory_space<vmem>>) attributes {dimension_semantics = [#tpu.dimension_semantics<parallel>], iteration_bounds = array<i64: 1>, scalar_prefetch = 0 : i64, scratch_operands = 0 : i64, tpu.core_type = #tpu.core_type<tc>, window_params = [{transform_indices = @transform_0, window_bounds = array<i64: 3, 32, 128>}, {transform_indices = @transform_1, window_bounds = array<i64: 32, 128>}, {transform_indices = @transform_2, window_bounds = array<i64: 3>}, {transform_indices = @transform_3, window_bounds = array<i64: 1, 32, 128>}]} {
    %c0 = arith.constant 0 : index
    %0 = memref.load %arg3[%c0] : memref<3xf32, #tpu.memory_space<smem>>
    %c1 = arith.constant 1 : index
    %1 = memref.load %arg3[%c1] : memref<3xf32, #tpu.memory_space<smem>>
    %c2 = arith.constant 2 : index
    %2 = memref.load %arg3[%c2] : memref<3xf32, #tpu.memory_space<smem>>
    %c1_i32 = arith.constant 1 : i32
    %3 = arith.addi %arg0, %c1_i32 : i32
    %c4096_i32 = arith.constant 4096 : i32
    %4 = arith.muli %3, %c4096_i32 : i32
    %c16_i32 = arith.constant 16 : i32
    %5 = arith.cmpi sgt, %4, %c16_i32 : i32
    %true = arith.constant true
    %6 = arith.xori %5, %true : i1
    %7 = arith.extui %6 : i1 to i32
    %c0_i32 = arith.constant 0 : i32
    %8 = arith.cmpi ne, %7, %c0_i32 : i32
    scf.if %8 {
      %cst = arith.constant 0.000000e+00 : f32
      %11 = vector.broadcast %cst : f32 to vector<32x128xf32>
      %c0_i32_1 = arith.constant 0 : i32
      %c32_i32 = arith.constant 32 : i32
      %12 = arith.muli %c0_i32_1, %c32_i32 : i32
      %13 = tpu.assume_multiple %12, 32 : i32
      %c0_2 = arith.constant 0 : index
      %14 = arith.index_cast %13 : i32 to index
      %c0_3 = arith.constant 0 : index
      %15 = vector.load %arg1[%c0_2, %14, %c0_3] : memref<3x32x128xf32, #tpu.memory_space<vmem>>, vector<1x32x128xf32>
      %16 = vector.shape_cast %15 : vector<1x32x128xf32> to vector<32x128xf32>
      %c1_4 = arith.constant 1 : index
      %17 = arith.index_cast %13 : i32 to index
      %c0_5 = arith.constant 0 : index
      %18 = vector.load %arg1[%c1_4, %17, %c0_5] : memref<3x32x128xf32, #tpu.memory_space<vmem>>, vector<1x32x128xf32>
      %19 = vector.shape_cast %18 : vector<1x32x128xf32> to vector<32x128xf32>
      %c2_6 = arith.constant 2 : index
      %20 = arith.index_cast %13 : i32 to index
      %c0_7 = arith.constant 0 : index
      %21 = vector.load %arg1[%c2_6, %20, %c0_7] : memref<3x32x128xf32, #tpu.memory_space<vmem>>, vector<1x32x128xf32>
      %22 = vector.shape_cast %21 : vector<1x32x128xf32> to vector<32x128xf32>
      %23 = arith.index_cast %13 : i32 to index
      %c0_8 = arith.constant 0 : index
      %24 = vector.load %arg2[%23, %c0_8] : memref<32x128xi32, #tpu.memory_space<vmem>>, vector<32x128xi32>
      %c1_i32_9 = arith.constant 1 : i32
      %25 = vector.broadcast %c1_i32_9 : i32 to vector<32x128xi32>
      %26 = arith.addi %24, %25 : vector<32x128xi32>
      %27 = arith.maximumf %16, %19 : vector<32x128xf32>
      %28 = arith.maximumf %27, %22 : vector<32x128xf32>
      %29 = arith.subf %16, %28 : vector<32x128xf32>
      %30 = math.exp %29 : vector<32x128xf32>
      %31 = arith.subf %19, %28 : vector<32x128xf32>
      %32 = math.exp %31 : vector<32x128xf32>
      %33 = arith.addf %30, %32 : vector<32x128xf32>
      %34 = arith.subf %22, %28 : vector<32x128xf32>
      %35 = math.exp %34 : vector<32x128xf32>
      %36 = arith.addf %33, %35 : vector<32x128xf32>
      %37 = math.log %36 : vector<32x128xf32>
      %38 = arith.addf %28, %37 : vector<32x128xf32>
      %cst_10 = arith.constant 0.000000e+00 : f32
      %39 = vector.broadcast %cst_10 : f32 to vector<32x128xf32>
      %40 = vector.broadcast %0 : f32 to vector<32x128xf32>
      %41 = arith.addf %39, %40 : vector<32x128xf32>
      %c1_i32_11 = arith.constant 1 : i32
      %42 = vector.broadcast %c1_i32_11 : i32 to vector<32x128xi32>
      %43 = arith.cmpi eq, %26, %42 : vector<32x128xi32>
      %44 = arith.select %43, %19, %16 : vector<32x128xi1>, vector<32x128xf32>
      %45 = vector.broadcast %1 : f32 to vector<32x128xf32>
      %46 = arith.select %43, %45, %41 : vector<32x128xi1>, vector<32x128xf32>
      %c2_i32 = arith.constant 2 : i32
      %47 = vector.broadcast %c2_i32 : i32 to vector<32x128xi32>
      %48 = arith.cmpi eq, %26, %47 : vector<32x128xi32>
      %49 = arith.select %48, %22, %44 : vector<32x128xi1>, vector<32x128xf32>
      %50 = vector.broadcast %2 : f32 to vector<32x128xf32>
      %51 = arith.select %48, %50, %46 : vector<32x128xi1>, vector<32x128xf32>
      %52 = arith.subf %38, %49 : vector<32x128xf32>
      %53 = arith.mulf %51, %52 : vector<32x128xf32>
      %cst_12 = arith.constant 0.000000e+00 : f32
      %54 = vector.broadcast %cst_12 : f32 to vector<32x128xf32>
      %55 = arith.subf %54, %53 : vector<32x128xf32>
      %56 = math.exp %55 : vector<32x128xf32>
      %cst_13 = arith.constant 1.000000e+00 : f32
      %57 = vector.broadcast %cst_13 : f32 to vector<32x128xf32>
      %58 = arith.subf %57, %56 : vector<32x128xf32>
      %59 = arith.mulf %58, %58 : vector<32x128xf32>
      %60 = arith.mulf %59, %53 : vector<32x128xf32>
      %61 = arith.addf %11, %60 : vector<32x128xf32>
      %c1_i32_14 = arith.constant 1 : i32
      %c0_15 = arith.constant 0 : index
      %c0_16 = arith.constant 0 : index
      %c0_17 = arith.constant 0 : index
      %62 = vector.load %arg4[%c0_15, %c0_16, %c0_17] : memref<1x32x128xf32, #tpu.memory_space<vmem>>, vector<1x32x128xf32>
      %63 = vector.shape_cast %62 : vector<1x32x128xf32> to vector<32x128xf32>
      %64 = vector.shape_cast %61 : vector<32x128xf32> to vector<1x32x128xf32>
      tpu.vector_store %arg4[%c0_15, %c0_16, %c0_17], %64 {strides = array<i32>} : memref<1x32x128xf32, #tpu.memory_space<vmem>>, vector<1x32x128xf32>,
    } else {
    }
    %9 = arith.extui %5 : i1 to i32
    %c0_i32_0 = arith.constant 0 : i32
    %10 = arith.cmpi ne, %9, %c0_i32_0 : i32
    scf.if %10 {
      %cst = arith.constant 0.000000e+00 : f32
      %11 = vector.broadcast %cst : f32 to vector<32x128xf32>
      %c0_i32_1 = arith.constant 0 : i32
      %c32_i32 = arith.constant 32 : i32
      %12 = arith.muli %c0_i32_1, %c32_i32 : i32
      %13 = tpu.assume_multiple %12, 32 : i32
      %c0_2 = arith.constant 0 : index
      %14 = arith.index_cast %13 : i32 to index
      %c0_3 = arith.constant 0 : index
      %15 = vector.load %arg1[%c0_2, %14, %c0_3] : memref<3x32x128xf32, #tpu.memory_space<vmem>>, vector<1x32x128xf32>
      %16 = vector.shape_cast %15 : vector<1x32x128xf32> to vector<32x128xf32>
      %c1_4 = arith.constant 1 : index
      %17 = arith.index_cast %13 : i32 to index
      %c0_5 = arith.constant 0 : index
      %18 = vector.load %arg1[%c1_4, %17, %c0_5] : memref<3x32x128xf32, #tpu.memory_space<vmem>>, vector<1x32x128xf32>
      %19 = vector.shape_cast %18 : vector<1x32x128xf32> to vector<32x128xf32>
      %c2_6 = arith.constant 2 : index
      %20 = arith.index_cast %13 : i32 to index
      %c0_7 = arith.constant 0 : index
      %21 = vector.load %arg1[%c2_6, %20, %c0_7] : memref<3x32x128xf32, #tpu.memory_space<vmem>>, vector<1x32x128xf32>
      %22 = vector.shape_cast %21 : vector<1x32x128xf32> to vector<32x128xf32>
      %23 = arith.index_cast %13 : i32 to index
      %c0_8 = arith.constant 0 : index
      %24 = vector.load %arg2[%23, %c0_8] : memref<32x128xi32, #tpu.memory_space<vmem>>, vector<32x128xi32>
      %c1_i32_9 = arith.constant 1 : i32
      %25 = vector.broadcast %c1_i32_9 : i32 to vector<32x128xi32>
      %26 = arith.addi %24, %25 : vector<32x128xi32>
      %27 = arith.maximumf %16, %19 : vector<32x128xf32>
      %28 = arith.maximumf %27, %22 : vector<32x128xf32>
      %29 = arith.subf %16, %28 : vector<32x128xf32>
      %30 = math.exp %29 : vector<32x128xf32>
      %31 = arith.subf %19, %28 : vector<32x128xf32>
      %32 = math.exp %31 : vector<32x128xf32>
      %33 = arith.addf %30, %32 : vector<32x128xf32>
      %34 = arith.subf %22, %28 : vector<32x128xf32>
      %35 = math.exp %34 : vector<32x128xf32>
      %36 = arith.addf %33, %35 : vector<32x128xf32>
      %37 = math.log %36 : vector<32x128xf32>
      %38 = arith.addf %28, %37 : vector<32x128xf32>
      %cst_10 = arith.constant 0.000000e+00 : f32
      %39 = vector.broadcast %cst_10 : f32 to vector<32x128xf32>
      %40 = vector.broadcast %0 : f32 to vector<32x128xf32>
      %41 = arith.addf %39, %40 : vector<32x128xf32>
      %c1_i32_11 = arith.constant 1 : i32
      %42 = vector.broadcast %c1_i32_11 : i32 to vector<32x128xi32>
      %43 = arith.cmpi eq, %26, %42 : vector<32x128xi32>
      %44 = arith.select %43, %19, %16 : vector<32x128xi1>, vector<32x128xf32>
      %45 = vector.broadcast %1 : f32 to vector<32x128xf32>
      %46 = arith.select %43, %45, %41 : vector<32x128xi1>, vector<32x128xf32>
      %c2_i32 = arith.constant 2 : i32
      %47 = vector.broadcast %c2_i32 : i32 to vector<32x128xi32>
      %48 = arith.cmpi eq, %26, %47 : vector<32x128xi32>
      %49 = arith.select %48, %22, %44 : vector<32x128xi1>, vector<32x128xf32>
      %50 = vector.broadcast %2 : f32 to vector<32x128xf32>
      %51 = arith.select %48, %50, %46 : vector<32x128xi1>, vector<32x128xf32>
      %52 = arith.subf %38, %49 : vector<32x128xf32>
      %53 = arith.mulf %51, %52 : vector<32x128xf32>
      %cst_12 = arith.constant 0.000000e+00 : f32
      %54 = vector.broadcast %cst_12 : f32 to vector<32x128xf32>
      %55 = arith.subf %54, %53 : vector<32x128xf32>
      %56 = math.exp %55 : vector<32x128xf32>
      %cst_13 = arith.constant 1.000000e+00 : f32
      %57 = vector.broadcast %cst_13 : f32 to vector<32x128xf32>
      %58 = arith.subf %57, %56 : vector<32x128xf32>
      %59 = arith.mulf %58, %58 : vector<32x128xf32>
      %60 = arith.mulf %59, %53 : vector<32x128xf32>
      %61 = tpu.iota {dimensions = array<i32: 0>} : vector<32x128xi32>
      %62 = tpu.iota {dimensions = array<i32: 1>} : vector<32x128xi32>
      %c32_i32_14 = arith.constant 32 : i32
      %63 = arith.muli %arg0, %c32_i32_14 : i32
      %64 = arith.addi %63, %13 : i32
      %65 = vector.broadcast %64 : i32 to vector<32x128xi32>
      %66 = arith.addi %65, %61 : vector<32x128xi32>
      %c128_i32 = arith.constant 128 : i32
      %67 = vector.broadcast %c128_i32 : i32 to vector<32x128xi32>
      %68 = arith.muli %66, %67 : vector<32x128xi32>
      %69 = arith.addi %68, %62 : vector<32x128xi32>
      %c16_i32_15 = arith.constant 16 : i32
      %70 = vector.broadcast %c16_i32_15 : i32 to vector<32x128xi32>
      %71 = arith.cmpi slt, %69, %70 : vector<32x128xi32>
      %cst_16 = arith.constant 0.000000e+00 : f32
      %72 = vector.broadcast %cst_16 : f32 to vector<32x128xf32>
      %73 = arith.select %71, %60, %72 : vector<32x128xi1>, vector<32x128xf32>
      %74 = arith.addf %11, %73 : vector<32x128xf32>
      %c1_i32_17 = arith.constant 1 : i32
      %c0_18 = arith.constant 0 : index
      %c0_19 = arith.constant 0 : index
      %c0_20 = arith.constant 0 : index
      %75 = vector.load %arg4[%c0_18, %c0_19, %c0_20] : memref<1x32x128xf32, #tpu.memory_space<vmem>>, vector<1x32x128xf32>
      %76 = vector.shape_cast %75 : vector<1x32x128xf32> to vector<32x128xf32>
      %77 = vector.shape_cast %74 : vector<32x128xf32> to vector<1x32x128xf32>
      tpu.vector_store %arg4[%c0_18, %c0_19, %c0_20], %77 {strides = array<i32>} : memref<1x32x128xf32, #tpu.memory_space<vmem>>, vector<1x32x128xf32>,
    } else {
    }
    return
  }
  func.func @transform_0(%arg0: i32) -> (i32, i32, i32) {
    %c0_i32 = arith.constant 0 : i32
    %c0_i32_0 = arith.constant 0 : i32
    %c0_i32_1 = arith.constant 0 : i32
    return %c0_i32, %arg0, %c0_i32_0 : i32, i32, i32
  }
  func.func @transform_1(%arg0: i32) -> (i32, i32) {
    %c0_i32 = arith.constant 0 : i32
    %c0_i32_0 = arith.constant 0 : i32
    return %arg0, %c0_i32 : i32, i32
  }
  func.func @transform_2(%arg0: i32) -> i32 {
    %c0_i32 = arith.constant 0 : i32
    %c0_i32_0 = arith.constant 0 : i32
    return %c0_i32 : i32
  }
  func.func @transform_3(%arg0: i32) -> (i32, i32, i32) {
    %c0_i32 = arith.constant 0 : i32
    %c0_i32_0 = arith.constant 0 : i32
    %c0_i32_1 = arith.constant 0 : i32
    return %arg0, %c0_i32, %c0_i32_0 : i32, i32, i32
  }
}

</mosaic_0001>

<llo_original>
// kernel: weighted_focal_cross_entropy_loss.1
$region0: #{weighted_focal_cross_entropy_loss.1}
  #allocation0 [shape = 'u32[]', space=smem, size = 0x4, offset = 0x4, fixed_abs, tag = 'smem constant byte address 0x4 - core index']
  #allocation1 [shape = 'u32[144,128]{1,0:T(1,128)}', space=vmem, size = 0x12000, scoped, tag = 'internal scratch']
  %s0 = inlined_call_operand.vmem [shape: f32[3,32,128], index: 0, kind: input, shape index: {}]
  %s1 = inlined_call_operand.vmem [shape: s32[32,128], index: 1, kind: input, shape index: {}]
  %s2 = inlined_call_operand.vmem [shape: f32[3], index: 2, kind: input, shape index: {}]
  %s3 = inlined_call_operand.vmem [shape: f32[1,32,128], index: 3, kind: output, shape index: {}]
  %s4 = sld [smem:[#allocation0]]
  $region34: #{weighted_focal_cross_entropy_loss.1} parent=0
    _
  %s6 = ssub.s32 1, %s4
  %s7 = scalar_select 0, %s6, %s4
  $region1: #{weighted_focal_cross_entropy_loss.1} parent=0
    #allocation2 [shape = 'u8[512]{0}', space=smem, size = 0x200, scoped, tag = 'input window, operand 2, single buffered']
    #allocation3 [shape = 's32[1]{0}', space=sflag, size = 0x4, scoped, tag = 'scoped memory for weighted_focal_cross_entropy_loss.1']
    %8 = vsyncpa [#allocation3], 0
    // Predicated region
    $region2: #{weighted_focal_cross_entropy_loss.1} parent=1 // pred_check
      _
    $region3: #{weighted_focal_cross_entropy_loss.1} parent=1 // pred_check_branch
      %10 = sbr.rel (0) target = $region5
    $region4: #{weighted_focal_cross_entropy_loss.1} parent=1 // pred_region
      _
    $region5: #{weighted_focal_cross_entropy_loss.1} parent=1 // pred_fallthru
      _
    // Predicated region
    $region6: #{weighted_focal_cross_entropy_loss.1} parent=1 // pred_check
      _
    $region7: #{weighted_focal_cross_entropy_loss.1} parent=1 // pred_check_branch
      %12 = sbr.rel (0) target = $region9
    $region8: #{weighted_focal_cross_entropy_loss.1} parent=1 // pred_region
      _
    $region9: #{weighted_focal_cross_entropy_loss.1} parent=1 // pred_fallthru
      _
    // Predicated region
    $region10: #{weighted_focal_cross_entropy_loss.1} parent=1 // pred_check
      _
    $region11: #{weighted_focal_cross_entropy_loss.1} parent=1 // pred_check_branch
      %14 = sbr.rel (0) target = $region13
    $region12: #{weighted_focal_cross_entropy_loss.1} parent=1 // pred_region
      %s16 = ssub.s32 16, 16
      %17 = vsyncadd [#allocation3], %s16
      %s19 = sshll.u32 %s2, 4
      %s20 = int_to_ptr.vmem [resolvable:$true] %s19
      %22 = dma.vmem_to_smem %s20, 16, [#allocation2], [#allocation3]
    $region13: #{weighted_focal_cross_entropy_loss.1} parent=1 // pred_fallthru
      _
    // Predicated region
    $region14: #{weighted_focal_cross_entropy_loss.1} parent=1 // pred_check
      _
    $region15: #{weighted_focal_cross_entropy_loss.1} parent=1 // pred_check_branch
      %24 = sbr.rel (0) target = $region17
    $region16: #{weighted_focal_cross_entropy_loss.1} parent=1 // pred_region
      %25 = dma.done [#allocation3], 16
    $region17: #{weighted_focal_cross_entropy_loss.1} parent=1 // pred_fallthru
      _
    %26 = sfence
    %s27 = sld [smem:[#allocation2]]
    %s28 = sld [smem:[#allocation2 + $0x1]]
    %s29 = sld [smem:[#allocation2 + $0x2]]
    %s30 = sadd.s32 0, 1
    %s31 = smul.u32 %s30, 4096
    %p32 = scmp.gt.s32.totalorder %s31, 16
    %p33 = scmp.le.s32.totalorder %s31, 16
    // Predicated region
    $region18: #{weighted_focal_cross_entropy_loss.1} parent=1 // pred_check
      %p34 = pneg %p33
    $region19: #{weighted_focal_cross_entropy_loss.1} parent=1 // pred_check_branch
      %36 = sbr.rel (%p34) target = $region21
    $region20: #{weighted_focal_cross_entropy_loss.1} parent=1 // pred_region
      %v37 = vld [vmem:[%s0] sm:$0xff]
      %v38 = vld [vmem:[%s0 + $0x8] sm:$0xff]
      %v39 = vld [vmem:[%s0 + $0x10] sm:$0xff]
      %v40 = vld [vmem:[%s0 + $0x18] sm:$0xff]
      %s41 = sadd.s32 0, 32
      %s42 = scalar_lea.vmem %s0, %s41
      %v43 = vld [vmem:[%s42] sm:$0xff]
      %v44 = vld [vmem:[%s42 + $0x8] sm:$0xff]
      %v45 = vld [vmem:[%s42 + $0x10] sm:$0xff]
      %v46 = vld [vmem:[%s42 + $0x18] sm:$0xff]
      %s47 = sadd.s32 0, 64
      %s48 = scalar_lea.vmem %s0, %s47
      %v49 = vld [vmem:[%s48] sm:$0xff]
      %v50 = vld [vmem:[%s48 + $0x8] sm:$0xff]
      %v51 = vld [vmem:[%s48 + $0x10] sm:$0xff]
      %v52 = vld [vmem:[%s48 + $0x18] sm:$0xff]
      %v53 = vld [vmem:[%s1] sm:$0xff]
      %v54 = vld [vmem:[%s1 + $0x8] sm:$0xff]
      %v55 = vld [vmem:[%s1 + $0x10] sm:$0xff]
      %v56 = vld [vmem:[%s1 + $0x18] sm:$0xff]
      %v57 = vadd.s32 %v53, 1
      %v58 = vadd.s32 %v54, 1
      %v59 = vadd.s32 %v55, 1
      %v60 = vadd.s32 %v56, 1
      %v61 = vmax.f32 %v37, %v43
      %v62 = vmax.f32 %v38, %v44
      %v63 = vmax.f32 %v39, %v45
      %v64 = vmax.f32 %v40, %v46
      %v65 = vmax.f32 %v61, %v49
      %v66 = vmax.f32 %v62, %v50
      %v67 = vmax.f32 %v63, %v51
      %v68 = vmax.f32 %v64, %v52
      %v69 = vsub.f32 %v37, %v65
      %v70 = vsub.f32 %v38, %v66
      %v71 = vsub.f32 %v39, %v67
      %v72 = vsub.f32 %v40, %v68
      %v73 = vmul.f32 %v69, 1.442695
      %v74 = vpow.pop %v73
      %v75 = vmul.f32 %v70, 1.442695
      %v76 = vpow.pop %v75
      %v77 = vmul.f32 %v71, 1.442695
      %v78 = vpow.pop %v77
      %v79 = vmul.f32 %v72, 1.442695
      %v80 = vpow.pop %v79
      %v81 = vsub.f32 %v43, %v65
      %v82 = vsub.f32 %v44, %v66
      %v83 = vsub.f32 %v45, %v67
      %v84 = vsub.f32 %v46, %v68
      %v85 = vmul.f32 %v81, 1.442695
      %v86 = vpow.pop %v85
      %v87 = vmul.f32 %v82, 1.442695
      %v88 = vpow.pop %v87
      %v89 = vmul.f32 %v83, 1.442695
      %v90 = vpow.pop %v89
      %v91 = vmul.f32 %v84, 1.442695
      %v92 = vpow.pop %v91
      %v93 = vadd.f32 %v74, %v86
      %v94 = vadd.f32 %v76, %v88
      %v95 = vadd.f32 %v78, %v90
      %v96 = vadd.f32 %v80, %v92
      %v97 = vsub.f32 %v49, %v65
      %v98 = vsub.f32 %v50, %v66
      %v99 = vsub.f32 %v51, %v67
      %v100 = vsub.f32 %v52, %v68
      %v101 = vmul.f32 %v97, 1.442695
      %v102 = vpow.pop %v101
      %v103 = vmul.f32 %v98, 1.442695
      %v104 = vpow.pop %v103
      %v105 = vmul.f32 %v99, 1.442695
      %v106 = vpow.pop %v105
      %v107 = vmul.f32 %v100, 1.442695
      %v108 = vpow.pop %v107
      %v109 = vadd.f32 %v93, %v102
      %v110 = vadd.f32 %v94, %v104
      %v111 = vadd.f32 %v95, %v106
      %v112 = vadd.f32 %v96, %v108
      %v113 = vlog2.pop %v109
      %v114 = vmul.f32 %v113, 0.6931472
      %v115 = vlog2.pop %v110
      %v116 = vmul.f32 %v115, 0.6931472
      %v117 = vlog2.pop %v111
      %v118 = vmul.f32 %v117, 0.6931472
      %v119 = vlog2.pop %v112
      %v120 = vmul.f32 %v119, 0.6931472
      %v121 = vadd.f32 %v65, %v114
      %v122 = vadd.f32 %v66, %v116
      %v123 = vadd.f32 %v67, %v118
      %v124 = vadd.f32 %v68, %v120
      %v125 = vstv %s27
      %v126 = vadd.f32 %v125, 0.0
      %vm127 = vcmp.eq.s32.totalorder %v57, 1
      %vm128 = vcmp.eq.s32.totalorder %v58, 1
      %vm129 = vcmp.eq.s32.totalorder %v59, 1
      %vm130 = vcmp.eq.s32.totalorder %v60, 1
      %v131 = vsel %vm127, %v43, %v37
      %v132 = vsel %vm128, %v44, %v38
      %v133 = vsel %vm129, %v45, %v39
      %v134 = vsel %vm130, %v46, %v40
      %v135 = vstv %s28
      %v136 = vsel %vm127, %v135, %v126
      %v137 = vsel %vm128, %v135, %v126
      %v138 = vsel %vm129, %v135, %v126
      %v139 = vsel %vm130, %v135, %v126
      %vm140 = vcmp.eq.s32.totalorder %v57, 2
      %vm141 = vcmp.eq.s32.totalorder %v58, 2
      %vm142 = vcmp.eq.s32.totalorder %v59, 2
      %vm143 = vcmp.eq.s32.totalorder %v60, 2
      %v144 = vsel %vm140, %v49, %v131
      %v145 = vsel %vm141, %v50, %v132
      %v146 = vsel %vm142, %v51, %v133
      %v147 = vsel %vm143, %v52, %v134
      %v148 = vstv %s29
      %v149 = vsel %vm140, %v148, %v136
      %v150 = vsel %vm141, %v148, %v137
      %v151 = vsel %vm142, %v148, %v138
      %v152 = vsel %vm143, %v148, %v139
      %v153 = vsub.f32 %v121, %v144
      %v154 = vsub.f32 %v122, %v145
      %v155 = vsub.f32 %v123, %v146
      %v156 = vsub.f32 %v124, %v147
      %v157 = vmul.f32 %v149, %v153
      %v158 = vmul.f32 %v150, %v154
      %v159 = vmul.f32 %v151, %v155
      %v160 = vmul.f32 %v152, %v156
      %v161 = vsub.f32 0.0, %v157
      %v162 = vsub.f32 0.0, %v158
      %v163 = vsub.f32 0.0, %v159
      %v164 = vsub.f32 0.0, %v160
      %v165 = vmul.f32 %v161, 1.442695
      %v166 = vpow.pop %v165
      %v167 = vmul.f32 %v162, 1.442695
      %v168 = vpow.pop %v167
      %v169 = vmul.f32 %v163, 1.442695
      %v170 = vpow.pop %v169
      %v171 = vmul.f32 %v164, 1.442695
      %v172 = vpow.pop %v171
      %v173 = vsub.f32 1.0, %v166
      %v174 = vsub.f32 1.0, %v168
      %v175 = vsub.f32 1.0, %v170
      %v176 = vsub.f32 1.0, %v172
      %v177 = vmul.f32 %v173, %v173
      %v178 = vmul.f32 %v174, %v174
      %v179 = vmul.f32 %v175, %v175
      %v180 = vmul.f32 %v176, %v176
      %v181 = vmul.f32 %v177, %v157
      %v182 = vmul.f32 %v178, %v158
      %v183 = vmul.f32 %v179, %v159
      %v184 = vmul.f32 %v180, %v160
      %v185 = vadd.f32 %v181, 0.0
      %v186 = vadd.f32 %v182, 0.0
      %v187 = vadd.f32 %v183, 0.0
      %v188 = vadd.f32 %v184, 0.0
      %189 = vst [vmem:[%s3] sm:$0xff] %v185
      %190 = vst [vmem:[%s3 + $0x8] sm:$0xff] %v186
      %191 = vst [vmem:[%s3 + $0x10] sm:$0xff] %v187
      %192 = vst [vmem:[%s3 + $0x18] sm:$0xff] %v188
    $region21: #{weighted_focal_cross_entropy_loss.1} parent=1 // pred_fallthru
      _
    // Predicated region
    $region22: #{weighted_focal_cross_entropy_loss.1} parent=1 // pred_check
      %p193 = pneg %p32
    $region23: #{weighted_focal_cross_entropy_loss.1} parent=1 // pred_check_branch
      %195 = sbr.rel (%p193) target = $region25
    $region24: #{weighted_focal_cross_entropy_loss.1} parent=1 // pred_region
      %v196 = vld [vmem:[%s0] sm:$0xff]
      %v197 = vld [vmem:[%s0 + $0x8] sm:$0xff]
      %v198 = vld [vmem:[%s0 + $0x10] sm:$0xff]
      %v199 = vld [vmem:[%s0 + $0x18] sm:$0xff]
      %s200 = sadd.s32 0, 32
      %s201 = scalar_lea.vmem %s0, %s200
      %v202 = vld [vmem:[%s201] sm:$0xff]
      %v203 = vld [vmem:[%s201 + $0x8] sm:$0xff]
      %v204 = vld [vmem:[%s201 + $0x10] sm:$0xff]
      %v205 = vld [vmem:[%s201 + $0x18] sm:$0xff]
      %s206 = sadd.s32 0, 64
      %s207 = scalar_lea.vmem %s0, %s206
      %v208 = vld [vmem:[%s207] sm:$0xff]
      %v209 = vld [vmem:[%s207 + $0x8] sm:$0xff]
      %v210 = vld [vmem:[%s207 + $0x10] sm:$0xff]
      %v211 = vld [vmem:[%s207 + $0x18] sm:$0xff]
      %v212 = vld [vmem:[%s1] sm:$0xff]
      %v213 = vld [vmem:[%s1 + $0x8] sm:$0xff]
      %v214 = vld [vmem:[%s1 + $0x10] sm:$0xff]
      %v215 = vld [vmem:[%s1 + $0x18] sm:$0xff]
      %v216 = vadd.s32 %v212, 1
      %v217 = vadd.s32 %v213, 1
      %v218 = vadd.s32 %v214, 1
      %v219 = vadd.s32 %v215, 1
      %v220 = vmax.f32 %v196, %v202
      %v221 = vmax.f32 %v197, %v203
      %v222 = vmax.f32 %v198, %v204
      %v223 = vmax.f32 %v199, %v205
      %v224 = vmax.f32 %v220, %v208
      %v225 = vmax.f32 %v221, %v209
      %v226 = vmax.f32 %v222, %v210
      %v227 = vmax.f32 %v223, %v211
      %v228 = vsub.f32 %v196, %v224
      %v229 = vsub.f32 %v197, %v225
      %v230 = vsub.f32 %v198, %v226
      %v231 = vsub.f32 %v199, %v227
      %v232 = vmul.f32 %v228, 1.442695
      %v233 = vpow.pop %v232
      %v234 = vmul.f32 %v229, 1.442695
      %v235 = vpow.pop %v234
      %v236 = vmul.f32 %v230, 1.442695
      %v237 = vpow.pop %v236
      %v238 = vmul.f32 %v231, 1.442695
      %v239 = vpow.pop %v238
      %v240 = vsub.f32 %v202, %v224
      %v241 = vsub.f32 %v203, %v225
      %v242 = vsub.f32 %v204, %v226
      %v243 = vsub.f32 %v205, %v227
      %v244 = vmul.f32 %v240, 1.442695
      %v245 = vpow.pop %v244
      %v246 = vmul.f32 %v241, 1.442695
      %v247 = vpow.pop %v246
      %v248 = vmul.f32 %v242, 1.442695
      %v249 = vpow.pop %v248
      %v250 = vmul.f32 %v243, 1.442695
      %v251 = vpow.pop %v250
      %v252 = vadd.f32 %v233, %v245
      %v253 = vadd.f32 %v235, %v247
      %v254 = vadd.f32 %v237, %v249
      %v255 = vadd.f32 %v239, %v251
      %v256 = vsub.f32 %v208, %v224
      %v257 = vsub.f32 %v209, %v225
      %v258 = vsub.f32 %v210, %v226
      %v259 = vsub.f32 %v211, %v227
      %v260 = vmul.f32 %v256, 1.442695
      %v261 = vpow.pop %v260
      %v262 = vmul.f32 %v257, 1.442695
      %v263 = vpow.pop %v262
      %v264 = vmul.f32 %v258, 1.442695
      %v265 = vpow.pop %v264
      %v266 = vmul.f32 %v259, 1.442695
      %v267 = vpow.pop %v266
      %v268 = vadd.f32 %v252, %v261
      %v269 = vadd.f32 %v253, %v263
      %v270 = vadd.f32 %v254, %v265
      %v271 = vadd.f32 %v255, %v267
      %v272 = vlog2.pop %v268
      %v273 = vmul.f32 %v272, 0.6931472
      %v274 = vlog2.pop %v269
      %v275 = vmul.f32 %v274, 0.6931472
      %v276 = vlog2.pop %v270
      %v277 = vmul.f32 %v276, 0.6931472
      %v278 = vlog2.pop %v271
      %v279 = vmul.f32 %v278, 0.6931472
      %v280 = vadd.f32 %v224, %v273
      %v281 = vadd.f32 %v225, %v275
      %v282 = vadd.f32 %v226, %v277
      %v283 = vadd.f32 %v227, %v279
      %v284 = vstv %s27
      %v285 = vadd.f32 %v284, 0.0
      %vm286 = vcmp.eq.s32.totalorder %v216, 1
      %vm287 = vcmp.eq.s32.totalorder %v217, 1
      %vm288 = vcmp.eq.s32.totalorder %v218, 1
      %vm289 = vcmp.eq.s32.totalorder %v219, 1
      %v290 = vsel %vm286, %v202, %v196
      %v291 = vsel %vm287, %v203, %v197
      %v292 = vsel %vm288, %v204, %v198
      %v293 = vsel %vm289, %v205, %v199
      %v294 = vstv %s28
      %v295 = vsel %vm286, %v294, %v285
      %v296 = vsel %vm287, %v294, %v285
      %v297 = vsel %vm288, %v294, %v285
      %v298 = vsel %vm289, %v294, %v285
      %vm299 = vcmp.eq.s32.totalorder %v216, 2
      %vm300 = vcmp.eq.s32.totalorder %v217, 2
      %vm301 = vcmp.eq.s32.totalorder %v218, 2
      %vm302 = vcmp.eq.s32.totalorder %v219, 2
      %v303 = vsel %vm299, %v208, %v290
      %v304 = vsel %vm300, %v209, %v291
      %v305 = vsel %vm301, %v210, %v292
      %v306 = vsel %vm302, %v211, %v293
      %v307 = vstv %s29
      %v308 = vsel %vm299, %v307, %v295
      %v309 = vsel %vm300, %v307, %v296
      %v310 = vsel %vm301, %v307, %v297
      %v311 = vsel %vm302, %v307, %v298
      %v312 = vsub.f32 %v280, %v303
      %v313 = vsub.f32 %v281, %v304
      %v314 = vsub.f32 %v282, %v305
      %v315 = vsub.f32 %v283, %v306
      %v316 = vmul.f32 %v308, %v312
      %v317 = vmul.f32 %v309, %v313
      %v318 = vmul.f32 %v310, %v314
      %v319 = vmul.f32 %v311, %v315
      %v320 = vsub.f32 0.0, %v316
      %v321 = vsub.f32 0.0, %v317
      %v322 = vsub.f32 0.0, %v318
      %v323 = vsub.f32 0.0, %v319
      %v324 = vmul.f32 %v320, 1.442695
      %v325 = vpow.pop %v324
      %v326 = vmul.f32 %v321, 1.442695
      %v327 = vpow.pop %v326
      %v328 = vmul.f32 %v322, 1.442695
      %v329 = vpow.pop %v328
      %v330 = vmul.f32 %v323, 1.442695
      %v331 = vpow.pop %v330
      %v332 = vsub.f32 1.0, %v325
      %v333 = vsub.f32 1.0, %v327
      %v334 = vsub.f32 1.0, %v329
      %v335 = vsub.f32 1.0, %v331
      %v336 = vmul.f32 %v332, %v332
      %v337 = vmul.f32 %v333, %v333
      %v338 = vmul.f32 %v334, %v334
      %v339 = vmul.f32 %v335, %v335
      %v340 = vmul.f32 %v336, %v316
      %v341 = vmul.f32 %v337, %v317
      %v342 = vmul.f32 %v338, %v318
      %v343 = vmul.f32 %v339, %v319
      %v344 = vlaneseq
      %v345 = vshrl.u32 %v344, 7
      %v346 = vadd.s32 %v345, 8
      %v347 = vadd.s32 %v345, 16
      %v348 = vadd.s32 %v345, 24
      %v349 = vlaneseq
      %v350 = vand.u32 %v349, 127
      %s351 = smul.u32 0, 32
      %s352 = sadd.s32 %s351, 0
      %v353 = vstv %s352
      %v354 = vadd.s32 %v353, %v345
      %v355 = vadd.s32 %v353, %v346
      %v356 = vadd.s32 %v353, %v347
      %v357 = vadd.s32 %v353, %v348
      %v358 = vmul.u32 %v354, 128
      %v359 = vmul.u32 %v355, 128
      %v360 = vmul.u32 %v356, 128
      %v361 = vmul.u32 %v357, 128
      %v362 = vadd.s32 %v358, %v350
      %v363 = vadd.s32 %v359, %v350
      %v364 = vadd.s32 %v360, %v350
      %v365 = vadd.s32 %v361, %v350
      %vm366 = vcmp.lt.s32.totalorder %v362, 16
      %vm367 = vcmp.lt.s32.totalorder %v363, 16
      %vm368 = vcmp.lt.s32.totalorder %v364, 16
      %vm369 = vcmp.lt.s32.totalorder %v365, 16
      %v370 = vsel %vm366, %v340, 0.0
      %v371 = vsel %vm367, %v341, 0.0
      %v372 = vsel %vm368, %v342, 0.0
      %v373 = vsel %vm369, %v343, 0.0
      %v374 = vadd.f32 %v370, 0.0
      %v375 = vadd.f32 %v371, 0.0
      %v376 = vadd.f32 %v372, 0.0
      %v377 = vadd.f32 %v373, 0.0
      %378 = vst [vmem:[%s3] sm:$0xff] %v374
      %379 = vst [vmem:[%s3 + $0x8] sm:$0xff] %v375
      %380 = vst [vmem:[%s3 + $0x10] sm:$0xff] %v376
      %381 = vst [vmem:[%s3 + $0x18] sm:$0xff] %v377
    $region25: #{weighted_focal_cross_entropy_loss.1} parent=1 // pred_fallthru
      _
    // Predicated region
    $region26: #{weighted_focal_cross_entropy_loss.1} parent=1 // pred_check
      _
    $region27: #{weighted_focal_cross_entropy_loss.1} parent=1 // pred_check_branch
      %383 = sbr.rel (0) target = $region29
    $region28: #{weighted_focal_cross_entropy_loss.1} parent=1 // pred_region
      _
    $region29: #{weighted_focal_cross_entropy_loss.1} parent=1 // pred_fallthru
      _
    // Predicated region
    $region30: #{weighted_focal_cross_entropy_loss.1} parent=1 // pred_check
      _
    $region31: #{weighted_focal_cross_entropy_loss.1} parent=1 // pred_check_branch
      %385 = sbr.rel (0) target = $region33
    $region32: #{weighted_focal_cross_entropy_loss.1} parent=1 // pred_region
      _
    $region33: #{weighted_focal_cross_entropy_loss.1} parent=1 // pred_fallthru
      _
    %386 = vsyncpa [#allocation3], 1

</llo_original>
